<compile_context>
chip_gen: v7x
topology: tpu7x:2x2x1
jax: 0.10.0
libtpu: 0.0.40
codegen_flags: <defaults>
</compile_context>

<pallas_src>
import jax
import jax.numpy as jnp
from jax import lax
from jax.experimental import pallas as pl
from jax.experimental.pallas import tpu as pltpu


# -------------------- Pallas kernel: embeddings (one-hot) + fused MLP --------------------
def _make_kernel(n_tables):
    def kernel(x_cat_ref, x_num_ref, *rest):
        lut_refs = rest[:n_tables]
        w1n_ref, b1_ref, w2_ref, b2_ref, w3r_ref, b3_ref, o_ref = rest[n_tables:]

        tb = x_cat_ref.shape[0]

        # ---- layer 1: numerical slice of W1 on the MXU ----
        h1 = jnp.dot(x_num_ref[...], w1n_ref[...],
                     preferred_element_type=jnp.float32) + b1_ref[...]

        # ---- layer 1: categorical part as one-hot @ (table @ W1-rows), exact fold ----
        for t in range(n_tables):
            lut = lut_refs[t][...]                      # (n_cat_t, H), VMEM-resident
            n_cat = lut.shape[0]
            idx = x_cat_ref[:, t:t + 1]                 # (TB, 1) int32
            iota = lax.broadcasted_iota(jnp.int32, (tb, n_cat), 1)
            onehot = jnp.where(iota == idx, jnp.float32(1.0), jnp.float32(0.0))
            h1 = h1 + jnp.dot(onehot, lut, preferred_element_type=jnp.float32)

        h1 = jnp.maximum(h1, 0.0)                       # ReLU; Dropout = identity (eval)

        # ---- layer 2 ----
        h2 = jnp.dot(h1, w2_ref[...], preferred_element_type=jnp.float32) + b2_ref[...]
        h2 = jnp.maximum(h2, 0.0)                       # ReLU; Dropout = identity (eval)

        # ---- layer 3 (N=1): VPU multiply + lane reduce instead of an N=1 MXU matmul ----
        out = jnp.sum(h2 * w3r_ref[...], axis=-1, keepdims=True) + b3_ref[0, 0]
        o_ref[...] = out.astype(o_ref.dtype)

    return kernel


def forecasting_forward(x_categorical, x_numerical, luts, w1_num, b1, w2, b2, w3_row, b3,
                        *, block_b=2048):
    B, n_tables = x_categorical.shape
    num_num = x_numerical.shape[1]
    H = w2.shape[0]
    H2 = w2.shape[1]

    # Batch tile: large to amortize per-grid-step overhead; sublane-aligned when tiling.
    tb = min(block_b, B)
    if B > tb:
        tb = max((tb // 8) * 8, 8)
    grid = (pl.cdiv(B, tb),)

    def resident(a):
        # Full-array block, constant index_map -> stays VMEM-resident across grid steps.
        return pl.BlockSpec(a.shape, lambda i: (0,) * a.ndim)

    in_specs = [
        pl.BlockSpec((tb, n_tables), lambda i: (i, 0)),   # x_categorical (tiled, pipelined)
        pl.BlockSpec((tb, num_num), lambda i: (i, 0)),    # x_numerical   (tiled, pipelined)
    ]
    in_specs += [resident(l) for l in luts]               # folded embedding tables
    in_specs += [resident(w1_num), resident(b1), resident(w2), resident(b2),
                 resident(w3_row)]
    in_specs += [pl.BlockSpec(memory_space=pltpu.SMEM)]   # b3 scalar in SMEM

    n_cat_total = sum(int(l.shape[0]) for l in luts)
    flops = int(2 * B * (n_cat_total * H + num_num * H + H * H2 + H2))
    bytes_accessed = int(
        B * (n_tables * 4 + num_num * 4 + 4)
        + 4 * (sum(int(l.size) for l in luts) + int(w1_num.size) + int(b1.size)
               + int(w2.size) + int(b2.size) + int(w3_row.size) + int(b3.size)))

    return pl.pallas_call(
        _make_kernel(n_tables),
        out_shape=jax.ShapeDtypeStruct((B, 1), jnp.float32),
        grid=grid,
        in_specs=in_specs,
        out_specs=pl.BlockSpec((tb, 1), lambda i: (i, 0)),
        compiler_params=pltpu.CompilerParams(dimension_semantics=("parallel",)),
        cost_estimate=pl.CostEstimate(flops=flops, transcendentals=0,
                                      bytes_accessed=bytes_accessed),
    )(x_categorical, x_numerical, *luts, w1_num, b1, w2, b2, w3_row, b3)


# -------------------- Model wrapper --------------------
class ForecastingModelPallas:
    def __init__(self, embedding_sizes, num_numerical_features, hidden_dim=32, dropout=0.2):
        key = jax.random.PRNGKey(42)
        ks = jax.random.split(key, len(embedding_sizes) + 6)

        # Embedding tables: (num_categories, emb_dim), N(0,1) like nn.Embedding.
        self.emb_tables = [
            jax.random.normal(ks[i], (n_cat, e_dim), dtype=jnp.float32)
            for i, (n_cat, e_dim) in enumerate(embedding_sizes)
        ]
        total_emb = sum(e for _, e in embedding_sizes)
        d_in = total_emb + num_numerical_features
        h = hidden_dim
        h2 = hidden_dim // 2
        j = len(embedding_sizes)

        def lin_init(kw, kb, fan_in, fan_out):
            # nn.Linear default: U(-1/sqrt(fan_in), 1/sqrt(fan_in))
            bound = 1.0 / jnp.sqrt(jnp.float32(fan_in))
            w = jax.random.uniform(kw, (fan_in, fan_out), jnp.float32, -bound, bound)
            b = jax.random.uniform(kb, (1, fan_out), jnp.float32, -bound, bound)
            return w, b

        self.w1, self.b1 = lin_init(ks[j + 0], ks[j + 1], d_in, h)
        self.w2, self.b2 = lin_init(ks[j + 2], ks[j + 3], h, h2)
        self.w3, self.b3 = lin_init(ks[j + 4], ks[j + 5], h2, 1)

        # Fold each embedding table through its rows of W1 (exact, matmul associativity):
        #   emb_i(idx) @ W1[rows_i] == (tbl_i @ W1[rows_i])[idx]
        hp = jax.lax.Precision.HIGHEST
        self.luts = []
        off = 0
        for tbl, (_, e_dim) in zip(self.emb_tables, embedding_sizes):
            self.luts.append(jnp.dot(tbl, self.w1[off:off + e_dim, :], precision=hp))
            off += e_dim
        self.w1_num = self.w1[off:, :]      # (num_numerical, H)
        self.w3_row = self.w3.T             # (1, H2) row for the VPU reduce

    def __call__(self, x_categorical, x_numerical):
        return forecasting_forward(
            x_categorical.astype(jnp.int32), x_numerical.astype(jnp.float32),
            self.luts, self.w1_num, self.b1, self.w2, self.b2, self.w3_row, self.b3)


# -------------------- Reference (plain JAX, high-precision matmuls) --------------------
def reference_forward(model, x_categorical, x_numerical):
    hp = jax.lax.Precision.HIGHEST
    embedded = [
        jnp.take(tbl, x_categorical[:, i], axis=0)
        for i, tbl in enumerate(model.emb_tables)
    ]
    x = jnp.concatenate(embedded + [x_numerical], axis=1).astype(jnp.float32)
    h1 = jnp.maximum(jnp.dot(x, model.w1, precision=hp) + model.b1, 0.0)
    h2 = jnp.maximum(jnp.dot(h1, model.w2, precision=hp) + model.b2, 0.0)
    return jnp.dot(h2, model.w3, precision=hp) + model.b3


if __name__ == "__main__":
    # Small deterministic example.
    embedding_sizes = [(10, 4), (7, 3)]   # total_embedding_dim = 7
    num_numerical = 5                     # input_dim = 12
    hidden_dim = 32
    batch = 8

    key = jax.random.PRNGKey(0)
    k_cat1, k_cat2, k_num = jax.random.split(key, 3)
    x_categorical = jnp.stack(
        [
            jax.random.randint(k_cat1, (batch,), 0, embedding_sizes[0][0]),
            jax.random.randint(k_cat2, (batch,), 0, embedding_sizes[1][0]),
        ],
        axis=1,
    )  # (batch, 2) int32
    x_numerical = jax.random.normal(k_num, (batch, num_numerical), dtype=jnp.float32)

    model = ForecastingModelPallas(embedding_sizes, num_numerical, hidden_dim)

    out = model(x_categorical, x_numerical)
    out = jax.block_until_ready(out)

    ref = reference_forward(model, x_categorical, x_numerical)
    assert out.shape == (batch, 1), out.shape
    # Tolerance accounts for TPU MXU default-precision (bf16-pass) differences between
    # the restructured fused path and the reference matmul chain.
    assert jnp.allclose(out, ref, atol=1e-2, rtol=1e-2), (out, ref)

    print("KERNEL_OK")
</pallas_src>

<mosaic_0001>
module attributes {stable_mosaic.version = 11 : i64} {
  func.func @kernel(%arg0: i32, %arg1: memref<8x2xi32, #tpu.memory_space<vmem>>, %arg2: memref<8x5xf32, #tpu.memory_space<vmem>>, %arg3: memref<10x32xf32, #tpu.memory_space<vmem>>, %arg4: memref<7x32xf32, #tpu.memory_space<vmem>>, %arg5: memref<5x32xf32, #tpu.memory_space<vmem>>, %arg6: memref<1x32xf32, #tpu.memory_space<vmem>>, %arg7: memref<32x16xf32, #tpu.memory_space<vmem>>, %arg8: memref<1x16xf32, #tpu.memory_space<vmem>>, %arg9: memref<1x16xf32, #tpu.memory_space<vmem>>, %arg10: memref<1x1xf32, #tpu.memory_space<smem>>, %arg11: memref<8x1xf32, #tpu.memory_space<vmem>>) attributes {dimension_semantics = [#tpu.dimension_semantics<parallel>], iteration_bounds = array<i64: 1>, scalar_prefetch = 0 : i64, scratch_operands = 0 : i64, tpu.core_type = #tpu.core_type<tc>, window_params = [{transform_indices = @transform_0, window_bounds = array<i64: 8, 2>}, {transform_indices = @transform_1, window_bounds = array<i64: 8, 5>}, {pipeline_mode = #tpu.pipeline_mode<synchronous>, transform_indices = @transform_2, window_bounds = array<i64: 10, 32>}, {pipeline_mode = #tpu.pipeline_mode<synchronous>, transform_indices = @transform_3, window_bounds = array<i64: 7, 32>}, {pipeline_mode = #tpu.pipeline_mode<synchronous>, transform_indices = @transform_4, window_bounds = array<i64: 5, 32>}, {pipeline_mode = #tpu.pipeline_mode<synchronous>, transform_indices = @transform_5, window_bounds = array<i64: 1, 32>}, {pipeline_mode = #tpu.pipeline_mode<synchronous>, transform_indices = @transform_6, window_bounds = array<i64: 32, 16>}, {pipeline_mode = #tpu.pipeline_mode<synchronous>, transform_indices = @transform_7, window_bounds = array<i64: 1, 16>}, {pipeline_mode = #tpu.pipeline_mode<synchronous>, transform_indices = @transform_8, window_bounds = array<i64: 1, 16>}, {transform_indices = @transform_9, window_bounds = array<i64: 1, 1>}, {transform_indices = @transform_10, window_bounds = array<i64: 8, 1>}]} {
    %c0 = arith.constant 0 : index
    %c0_0 = arith.constant 0 : index
    %0 = vector.load %arg2[%c0, %c0_0] : memref<8x5xf32, #tpu.memory_space<vmem>>, vector<8x5xf32>
    %c0_1 = arith.constant 0 : index
    %c0_2 = arith.constant 0 : index
    %1 = vector.load %arg5[%c0_1, %c0_2] : memref<5x32xf32, #tpu.memory_space<vmem>>, vector<5x32xf32>
    %cst = arith.constant dense<0.000000e+00> : vector<8x32xf32>
    %2 = tpu.matmul %0, %1, %cst {dimension_numbers = #tpu.dot_dimension_numbers<[1], [0], [0], [1], [0, 0, 1, 1], [], []>} : vector<8x5xf32>, vector<5x32xf32>, vector<8x32xf32> -> vector<8x32xf32>
    %c0_3 = arith.constant 0 : index
    %c0_4 = arith.constant 0 : index
    %3 = vector.load %arg6[%c0_3, %c0_4] : memref<1x32xf32, #tpu.memory_space<vmem>>, vector<1x32xf32>
    %4 = vector.broadcast %3 : vector<1x32xf32> to vector<8x32xf32>
    %5 = arith.addf %2, %4 : vector<8x32xf32>
    %c0_5 = arith.constant 0 : index
    %c0_6 = arith.constant 0 : index
    %6 = vector.load %arg3[%c0_5, %c0_6] : memref<10x32xf32, #tpu.memory_space<vmem>>, vector<10x32xf32>
    %c0_7 = arith.constant 0 : index
    %c0_8 = arith.constant 0 : index
    %7 = vector.load %arg1[%c0_7, %c0_8] : memref<8x2xi32, #tpu.memory_space<vmem>>, vector<8x1xi32>
    %8 = tpu.iota {dimensions = array<i32: 1>} : vector<8x10xi32>
    %9 = vector.broadcast %7 : vector<8x1xi32> to vector<8x10xi32>
    %10 = arith.cmpi eq, %8, %9 : vector<8x10xi32>
    %cst_9 = arith.constant 1.000000e+00 : f32
    %cst_10 = arith.constant 0.000000e+00 : f32
    %11 = vector.broadcast %cst_9 : f32 to vector<8x10xf32>
    %12 = vector.broadcast %cst_10 : f32 to vector<8x10xf32>
    %13 = arith.select %10, %11, %12 : vector<8x10xi1>, vector<8x10xf32>
    %cst_11 = arith.constant dense<0.000000e+00> : vector<8x32xf32>
    %14 = tpu.matmul %13, %6, %cst_11 {dimension_numbers = #tpu.dot_dimension_numbers<[1], [0], [0], [1], [0, 0, 1, 1], [], []>} : vector<8x10xf32>, vector<10x32xf32>, vector<8x32xf32> -> vector<8x32xf32>
    %15 = arith.addf %5, %14 : vector<8x32xf32>
    %c0_12 = arith.constant 0 : index
    %c0_13 = arith.constant 0 : index
    %16 = vector.load %arg4[%c0_12, %c0_13] : memref<7x32xf32, #tpu.memory_space<vmem>>, vector<7x32xf32>
    %c0_14 = arith.constant 0 : index
    %c1 = arith.constant 1 : index
    %17 = vector.load %arg1[%c0_14, %c1] : memref<8x2xi32, #tpu.memory_space<vmem>>, vector<8x1xi32>
    %18 = tpu.iota {dimensions = array<i32: 1>} : vector<8x7xi32>
    %19 = vector.broadcast %17 : vector<8x1xi32> to vector<8x7xi32>
    %20 = arith.cmpi eq, %18, %19 : vector<8x7xi32>
    %cst_15 = arith.constant 1.000000e+00 : f32
    %cst_16 = arith.constant 0.000000e+00 : f32
    %21 = vector.broadcast %cst_15 : f32 to vector<8x7xf32>
    %22 = vector.broadcast %cst_16 : f32 to vector<8x7xf32>
    %23 = arith.select %20, %21, %22 : vector<8x7xi1>, vector<8x7xf32>
    %cst_17 = arith.constant dense<0.000000e+00> : vector<8x32xf32>
    %24 = tpu.matmul %23, %16, %cst_17 {dimension_numbers = #tpu.dot_dimension_numbers<[1], [0], [0], [1], [0, 0, 1, 1], [], []>} : vector<8x7xf32>, vector<7x32xf32>, vector<8x32xf32> -> vector<8x32xf32>
    %25 = arith.addf %15, %24 : vector<8x32xf32>
    %cst_18 = arith.constant 0.000000e+00 : f32
    %26 = vector.broadcast %cst_18 : f32 to vector<8x32xf32>
    %27 = arith.maximumf %25, %26 : vector<8x32xf32>
    %c0_19 = arith.constant 0 : index
    %c0_20 = arith.constant 0 : index
    %28 = vector.load %arg7[%c0_19, %c0_20] : memref<32x16xf32, #tpu.memory_space<vmem>>, vector<32x16xf32>
    %cst_21 = arith.constant dense<0.000000e+00> : vector<8x16xf32>
    %29 = tpu.matmul %27, %28, %cst_21 {dimension_numbers = #tpu.dot_dimension_numbers<[1], [0], [0], [1], [0, 0, 1, 1], [], []>} : vector<8x32xf32>, vector<32x16xf32>, vector<8x16xf32> -> vector<8x16xf32>
    %c0_22 = arith.constant 0 : index
    %c0_23 = arith.constant 0 : index
    %30 = vector.load %arg8[%c0_22, %c0_23] : memref<1x16xf32, #tpu.memory_space<vmem>>, vector<1x16xf32>
    %31 = vector.broadcast %30 : vector<1x16xf32> to vector<8x16xf32>
    %32 = arith.addf %29, %31 : vector<8x16xf32>
    %cst_24 = arith.constant 0.000000e+00 : f32
    %33 = vector.broadcast %cst_24 : f32 to vector<8x16xf32>
    %34 = arith.maximumf %32, %33 : vector<8x16xf32>
    %c0_25 = arith.constant 0 : index
    %c0_26 = arith.constant 0 : index
    %35 = vector.load %arg9[%c0_25, %c0_26] : memref<1x16xf32, #tpu.memory_space<vmem>>, vector<1x16xf32>
    %36 = vector.broadcast %35 : vector<1x16xf32> to vector<8x16xf32>
    %37 = arith.mulf %34, %36 : vector<8x16xf32>
    %cst_27 = arith.constant dense<0.000000e+00> : vector<8xf32>
    %38 = vector.multi_reduction <add>, %37, %cst_27 [1] : vector<8x16xf32> to vector<8xf32>
    %39 = vector.shape_cast %38 : vector<8xf32> to vector<8x1xf32>
    %c0_28 = arith.constant 0 : index
    %c0_29 = arith.constant 0 : index
    %40 = memref.load %arg10[%c0_28, %c0_29] : memref<1x1xf32, #tpu.memory_space<smem>>
    %41 = vector.broadcast %40 : f32 to vector<8x1xf32>
    %42 = arith.addf %39, %41 : vector<8x1xf32>
    %c0_30 = arith.constant 0 : index
    %c0_31 = arith.constant 0 : index
    %43 = vector.load %arg11[%c0_30, %c0_31] : memref<8x1xf32, #tpu.memory_space<vmem>>, vector<8x1xf32>
    tpu.vector_store %arg11[%c0_30, %c0_31], %42 {strides = array<i32>} : memref<8x1xf32, #tpu.memory_space<vmem>>, vector<8x1xf32>,
    return
  }
  func.func @transform_0(%arg0: i32) -> (i32, i32) {
    %c0_i32 = arith.constant 0 : i32
    %c0_i32_0 = arith.constant 0 : i32
    return %arg0, %c0_i32 : i32, i32
  }
  func.func @transform_1(%arg0: i32) -> (i32, i32) {
    %c0_i32 = arith.constant 0 : i32
    %c0_i32_0 = arith.constant 0 : i32
    return %arg0, %c0_i32 : i32, i32
  }
  func.func @transform_2(%arg0: i32) -> (i32, i32) {
    %c0_i32 = arith.constant 0 : i32
    %c0_i32_0 = arith.constant 0 : i32
    %c0_i32_1 = arith.constant 0 : i32
    return %c0_i32, %c0_i32_0 : i32, i32
  }
  func.func @transform_3(%arg0: i32) -> (i32, i32) {
    %c0_i32 = arith.constant 0 : i32
    %c0_i32_0 = arith.constant 0 : i32
    %c0_i32_1 = arith.constant 0 : i32
    return %c0_i32, %c0_i32_0 : i32, i32
  }
  func.func @transform_4(%arg0: i32) -> (i32, i32) {
    %c0_i32 = arith.constant 0 : i32
    %c0_i32_0 = arith.constant 0 : i32
    %c0_i32_1 = arith.constant 0 : i32
    return %c0_i32, %c0_i32_0 : i32, i32
  }
  func.func @transform_5(%arg0: i32) -> (i32, i32) {
    %c0_i32 = arith.constant 0 : i32
    %c0_i32_0 = arith.constant 0 : i32
    %c0_i32_1 = arith.constant 0 : i32
    return %c0_i32, %c0_i32_0 : i32, i32
  }
  func.func @transform_6(%arg0: i32) -> (i32, i32) {
    %c0_i32 = arith.constant 0 : i32
    %c0_i32_0 = arith.constant 0 : i32
    %c0_i32_1 = arith.constant 0 : i32
    return %c0_i32, %c0_i32_0 : i32, i32
  }
  func.func @transform_7(%arg0: i32) -> (i32, i32) {
    %c0_i32 = arith.constant 0 : i32
    %c0_i32_0 = arith.constant 0 : i32
    %c0_i32_1 = arith.constant 0 : i32
    return %c0_i32, %c0_i32_0 : i32, i32
  }
  func.func @transform_8(%arg0: i32) -> (i32, i32) {
    %c0_i32 = arith.constant 0 : i32
    %c0_i32_0 = arith.constant 0 : i32
    %c0_i32_1 = arith.constant 0 : i32
    return %c0_i32, %c0_i32_0 : i32, i32
  }
  func.func @transform_9(%arg0: i32) -> (i32, i32) {
    %c0_i32 = arith.constant 0 : i32
    %c0_i32_0 = arith.constant 0 : i32
    %c0_i32_1 = arith.constant 0 : i32
    return %c0_i32, %c0_i32_0 : i32, i32
  }
  func.func @transform_10(%arg0: i32) -> (i32, i32) {
    %c0_i32 = arith.constant 0 : i32
    %c0_i32_0 = arith.constant 0 : i32
    return %arg0, %c0_i32 : i32, i32
  }
}

</mosaic_0001>

<llo_original>
// kernel: tpu_custom_call.1
$region0: #{tpu_custom_call.1}
  #allocation0 [shape = 'u32[]', space=smem, size = 0x4, offset = 0x4, fixed_abs, tag = 'smem constant byte address 0x4 - core index']
  #allocation1 [shape = 'u32[144,128]{1,0:T(1,128)}', space=vmem, size = 0x12000, scoped, tag = 'internal scratch']
  #allocation2 [shape = 'f32[1,1]{1,0:T(1,128)S(6)}', space=smem, size = 0x200, scoped, tag = 'scoped memory for tpu_custom_call.1']
  %s0 = inlined_call_operand.vmem [shape: s32[8,2], index: 0, kind: input, shape index: {}]
  %s1 = inlined_call_operand.vmem [shape: f32[8,5], index: 1, kind: input, shape index: {}]
  %s2 = inlined_call_operand.vmem [shape: f32[10,32], index: 2, kind: input, shape index: {}]
  %s3 = inlined_call_operand.vmem [shape: f32[7,32], index: 3, kind: input, shape index: {}]
  %s4 = inlined_call_operand.vmem [shape: f32[5,32], index: 4, kind: input, shape index: {}]
  %s5 = inlined_call_operand.vmem [shape: f32[1,32], index: 5, kind: input, shape index: {}]
  %s6 = inlined_call_operand.vmem [shape: f32[32,16], index: 6, kind: input, shape index: {}]
  %s7 = inlined_call_operand.vmem [shape: f32[1,16], index: 7, kind: input, shape index: {}]
  %s8 = inlined_call_operand.vmem [shape: f32[1,16], index: 8, kind: input, shape index: {}]
  %s9 = inlined_call_operand.<no memory space> [shape: f32[1,1], index: 9, kind: input, shape index: {}]
  %s10 = inlined_call_operand.vmem [shape: f32[8,1], index: 10, kind: output, shape index: {}]
  %s11 = sld [smem:[#allocation0]]
  $region50: #{tpu_custom_call.1} parent=0
    _
  %s13 = ssub.s32 1, %s11
  %s14 = scalar_select 0, %s13, %s11
  %15 = sst [smem:[#allocation2]] %s9
  // Predicated region
  $region2: #{tpu_custom_call.1} parent=0 // pred_check
    _
  $region3: #{tpu_custom_call.1} parent=0 // pred_check_branch
    %17 = sbr.rel (0) target = $region5
  $region4: #{tpu_custom_call.1} parent=0 // pred_region
    _
  $region5: #{tpu_custom_call.1} parent=0 // pred_fallthru
    _
  // Predicated region
  $region6: #{tpu_custom_call.1} parent=0 // pred_check
    _
  $region7: #{tpu_custom_call.1} parent=0 // pred_check_branch
    %19 = sbr.rel (0) target = $region9
  $region8: #{tpu_custom_call.1} parent=0 // pred_region
    _
  $region9: #{tpu_custom_call.1} parent=0 // pred_fallthru
    _
  // Predicated region
  $region10: #{tpu_custom_call.1} parent=0 // pred_check
    _
  $region11: #{tpu_custom_call.1} parent=0 // pred_check_branch
    %21 = sbr.rel (0) target = $region13
  $region12: #{tpu_custom_call.1} parent=0 // pred_region
    _
  $region13: #{tpu_custom_call.1} parent=0 // pred_fallthru
    _
  // Predicated region
  $region14: #{tpu_custom_call.1} parent=0 // pred_check
    _
  $region15: #{tpu_custom_call.1} parent=0 // pred_check_branch
    %23 = sbr.rel (0) target = $region17
  $region16: #{tpu_custom_call.1} parent=0 // pred_region
    _
  $region17: #{tpu_custom_call.1} parent=0 // pred_fallthru
    _
  // Predicated region
  $region18: #{tpu_custom_call.1} parent=0 // pred_check
    _
  $region19: #{tpu_custom_call.1} parent=0 // pred_check_branch
    %25 = sbr.rel (0) target = $region21
  $region20: #{tpu_custom_call.1} parent=0 // pred_region
    _
  $region21: #{tpu_custom_call.1} parent=0 // pred_fallthru
    _
  // Predicated region
  $region22: #{tpu_custom_call.1} parent=0 // pred_check
    _
  $region23: #{tpu_custom_call.1} parent=0 // pred_check_branch
    %27 = sbr.rel (0) target = $region25
  $region24: #{tpu_custom_call.1} parent=0 // pred_region
    _
  $region25: #{tpu_custom_call.1} parent=0 // pred_fallthru
    _
  // Predicated region
  $region26: #{tpu_custom_call.1} parent=0 // pred_check
    _
  $region27: #{tpu_custom_call.1} parent=0 // pred_check_branch
    %29 = sbr.rel (0) target = $region29
  $region28: #{tpu_custom_call.1} parent=0 // pred_region
    _
  $region29: #{tpu_custom_call.1} parent=0 // pred_fallthru
    _
  // Predicated region
  $region30: #{tpu_custom_call.1} parent=0 // pred_check
    _
  $region31: #{tpu_custom_call.1} parent=0 // pred_check_branch
    %31 = sbr.rel (0) target = $region33
  $region32: #{tpu_custom_call.1} parent=0 // pred_region
    _
  $region33: #{tpu_custom_call.1} parent=0 // pred_fallthru
    _
  // Predicated region
  $region34: #{tpu_custom_call.1} parent=0 // pred_check
    _
  $region35: #{tpu_custom_call.1} parent=0 // pred_check_branch
    %33 = sbr.rel (0) target = $region37
  $region36: #{tpu_custom_call.1} parent=0 // pred_region
    _
  $region37: #{tpu_custom_call.1} parent=0 // pred_fallthru
    _
  // Predicated region
  $region38: #{tpu_custom_call.1} parent=0 // pred_check
    _
  $region39: #{tpu_custom_call.1} parent=0 // pred_check_branch
    %35 = sbr.rel (0) target = $region41
  $region40: #{tpu_custom_call.1} parent=0 // pred_region
    _
  $region41: #{tpu_custom_call.1} parent=0 // pred_fallthru
    _
  %v36 = vld [vmem:[%s1] sm:$0xff]
  %v37 = vld [vmem:[%s4] sm:$0x1f]
  %v38 = vld [vmem:[%s5] sm:$0x1]
  %v40 = vlaneseq
  %v41 = vshrl.u32 %v40, 7
  %v42 = vsub.s32 0, %v41
  %v43 = vrot.slane %v38, %v42
  %vm45 = vcmask 39936
  %v47 = vsel %vm45, %v36, 0
  %vm49 = vcmask 1044480
  %v51 = vsel %vm49, %v37, 0
  %53 = vmatprep.subr.mxu0 0.0
  %54 = vmatpush1.msra.mxu0 %v51
  %55 = vmatprep.subr.mxu0 0.0
  %56 = vmatpush1.msra.mxu0 0.0
  %57 = vmatprep.subr.mxu0 0.0
  %58 = vmatpush1.msra.mxu0 0.0
  %59 = vmatprep.subr.mxu0 0.0
  %60 = vmatpush1.msra.mxu0 0.0
  %61 = vmatprep.subr.mxu0 0.0
  %62 = vmatpush1.msra.mxu0 0.0
  %63 = vmatprep.subr.mxu0 0.0
  %64 = vmatpush1.msra.mxu0 0.0
  %65 = vmatprep.subr.mxu0 0.0
  %66 = vmatpush1.msra.mxu0 0.0
  %67 = vmatprep.subr.mxu0 0.0
  %68 = vmatpush1.msra.mxu0 0.0
  %69 = vmatprep.subr.mxu0 0.0
  %70 = vmatpush1.msra.mxu0 0.0
  %71 = vmatprep.subr.mxu0 0.0
  %72 = vmatpush1.msra.mxu0 0.0
  %73 = vmatprep.subr.mxu0 0.0
  %74 = vmatpush1.msra.mxu0 0.0
  %75 = vmatprep.subr.mxu0 0.0
  %76 = vmatpush1.msra.mxu0 0.0
  %77 = vmatprep.subr.mxu0 0.0
  %78 = vmatpush1.msra.mxu0 0.0
  %79 = vmatprep.subr.mxu0 0.0
  %80 = vmatpush1.msra.mxu0 0.0
  %81 = vmatprep.subr.mxu0 0.0
  %82 = vmatpush1.msra.mxu0 0.0
  %83 = vmatprep.subr.mxu0 0.0
  %84 = vmatpush1.msra.mxu0 0.0
  %85 = vmatprep.subr.mxu0 0.0
  %86 = vmatpush1.msra.mxu0 0.0
  %87 = vmatprep.subr.mxu0 0.0
  %88 = vmatpush1.msra.mxu0 0.0
  %89 = vmatprep.subr.mxu0 0.0
  %90 = vmatpush1.msra.mxu0 0.0
  %91 = vmatprep.subr.mxu0 0.0
  %92 = vmatpush1.msra.mxu0 0.0
  %93 = vmatprep.subr.mxu0 0.0
  %94 = vmatpush1.msra.mxu0 0.0
  %95 = vmatprep.subr.mxu0 0.0
  %96 = vmatpush1.msra.mxu0 0.0
  %97 = vmatprep.subr.mxu0 0.0
  %98 = vmatpush1.msra.mxu0 0.0
  %99 = vmatprep.subr.mxu0 0.0
  %100 = vmatpush1.msra.mxu0 0.0
  %101 = vmatprep.subr.mxu0 0.0
  %102 = vmatpush1.msra.mxu0 0.0
  %103 = vmatprep.subr.mxu0 0.0
  %104 = vmatpush1.msra.mxu0 0.0
  %105 = vmatprep.subr.mxu0 0.0
  %106 = vmatpush1.msra.mxu0 0.0
  %107 = vmatprep.subr.mxu0 0.0
  %108 = vmatpush1.msra.mxu0 0.0
  %109 = vmatprep.subr.mxu0 0.0
  %110 = vmatpush1.msra.mxu0 0.0
  %111 = vmatprep.subr.mxu0 0.0
  %112 = vmatpush1.msra.mxu0 0.0
  %113 = vmatprep.subr.mxu0 0.0
  %114 = vmatpush1.msra.mxu0 0.0
  %115 = vmatprep.subr.mxu0 0.0
  %116 = vmatpush1.msra.mxu0 0.0
  %117 = vmatprep.mubr.f32.mxu0 0.0
  %118 = vmatmul.mubr.f32.gmra.mrb[0].mxu0 %v47
  %v119 = vpop.f32.mrb[0].mxu0
  %v120 = vadd.f32 %v43, %v119
  %v121 = vpop.f32.mrb[0].mxu0
  %122 = vdwg.mxu0
  %v123 = vld [vmem:[%s2] sm:$0xff]
  %v124 = vld [vmem:[%s2 + $0x8] sm:$0x3]
  %v125 = vld [vmem:[%s0] sm:$0xff]
  %v126 = vlaneseq
  %v127 = vand.u32 %v126, 127
  %128 = vset.pattern.permute.xlu0 0
  %129 = vperm.xlu0 %128, %v125
  %v130 = vpop.permute.xlu0 %129
  %vm131 = vcmp.eq.s32.totalorder %v127, %v130
  %v132 = vsel %vm131, 1.0, 0.0
  %vm133 = vcmask 80896
  %v135 = vsel %vm133, %v132, 0
  %vm137 = vcmask 1041408
  %v139 = vsel %vm137, %v124, 0
  %141 = vmatprep.subr.mxu0 0.0
  %142 = vmatpush1.msra.mxu0 %v123
  %143 = vmatprep.subr.mxu0 0.0
  %144 = vmatpush1.msra.mxu0 %v139
  %145 = vmatprep.subr.mxu0 0.0
  %146 = vmatpush1.msra.mxu0 0.0
  %147 = vmatprep.subr.mxu0 0.0
  %148 = vmatpush1.msra.mxu0 0.0
  %149 = vmatprep.subr.mxu0 0.0
  %150 = vmatpush1.msra.mxu0 0.0
  %151 = vmatprep.subr.mxu0 0.0
  %152 = vmatpush1.msra.mxu0 0.0
  %153 = vmatprep.subr.mxu0 0.0
  %154 = vmatpush1.msra.mxu0 0.0
  %155 = vmatprep.subr.mxu0 0.0
  %156 = vmatpush1.msra.mxu0 0.0
  %157 = vmatprep.subr.mxu0 0.0
  %158 = vmatpush1.msra.mxu0 0.0
  %159 = vmatprep.subr.mxu0 0.0
  %160 = vmatpush1.msra.mxu0 0.0
  %161 = vmatprep.subr.mxu0 0.0
  %162 = vmatpush1.msra.mxu0 0.0
  %163 = vmatprep.subr.mxu0 0.0
  %164 = vmatpush1.msra.mxu0 0.0
  %165 = vmatprep.subr.mxu0 0.0
  %166 = vmatpush1.msra.mxu0 0.0
  %167 = vmatprep.subr.mxu0 0.0
  %168 = vmatpush1.msra.mxu0 0.0
  %169 = vmatprep.subr.mxu0 0.0
  %170 = vmatpush1.msra.mxu0 0.0
  %171 = vmatprep.subr.mxu0 0.0
  %172 = vmatpush1.msra.mxu0 0.0
  %173 = vmatprep.subr.mxu0 0.0
  %174 = vmatpush1.msra.mxu0 0.0
  %175 = vmatprep.subr.mxu0 0.0
  %176 = vmatpush1.msra.mxu0 0.0
  %177 = vmatprep.subr.mxu0 0.0
  %178 = vmatpush1.msra.mxu0 0.0
  %179 = vmatprep.subr.mxu0 0.0
  %180 = vmatpush1.msra.mxu0 0.0
  %181 = vmatprep.subr.mxu0 0.0
  %182 = vmatpush1.msra.mxu0 0.0
  %183 = vmatprep.subr.mxu0 0.0
  %184 = vmatpush1.msra.mxu0 0.0
  %185 = vmatprep.subr.mxu0 0.0
  %186 = vmatpush1.msra.mxu0 0.0
  %187 = vmatprep.subr.mxu0 0.0
  %188 = vmatpush1.msra.mxu0 0.0
  %189 = vmatprep.subr.mxu0 0.0
  %190 = vmatpush1.msra.mxu0 0.0
  %191 = vmatprep.subr.mxu0 0.0
  %192 = vmatpush1.msra.mxu0 0.0
  %193 = vmatprep.subr.mxu0 0.0
  %194 = vmatpush1.msra.mxu0 0.0
  %195 = vmatprep.subr.mxu0 0.0
  %196 = vmatpush1.msra.mxu0 0.0
  %197 = vmatprep.subr.mxu0 0.0
  %198 = vmatpush1.msra.mxu0 0.0
  %199 = vmatprep.subr.mxu0 0.0
  %200 = vmatpush1.msra.mxu0 0.0
  %201 = vmatprep.subr.mxu0 0.0
  %202 = vmatpush1.msra.mxu0 0.0
  %203 = vmatprep.subr.mxu0 0.0
  %204 = vmatpush1.msra.mxu0 0.0
  %205 = vmatprep.mubr.f32.mxu0 0.0
  %206 = vmatmul.mubr.f32.gmra.mrb[0].mxu0 %v135
  %v207 = vpop.f32.mrb[0].mxu0
  %v208 = vadd.f32 0.0, %v207
  %v209 = vpop.f32.mrb[0].mxu0
  %210 = vdwg.mxu0
  %v211 = vadd.f32 %v120, %v208
  %v212 = vld [vmem:[%s3] sm:$0x7f]
  %213 = vset.pattern.permute.xlu0 1
  %214 = vperm.xlu0 %213, %v125
  %v215 = vpop.permute.xlu0 %214
  %vm216 = vcmp.eq.s32.totalorder %v127, %v215
  %v217 = vsel %vm216, 1.0, 0.0
  %vm218 = vcmask 56320
  %v220 = vsel %vm218, %v217, 0
  %vm222 = vcmask 1046528
  %v224 = vsel %vm222, %v212, 0
  %226 = vmatprep.subr.mxu0 0.0
  %227 = vmatpush1.msra.mxu0 %v224
  %228 = vmatprep.subr.mxu0 0.0
  %229 = vmatpush1.msra.mxu0 0.0
  %230 = vmatprep.subr.mxu0 0.0
  %231 = vmatpush1.msra.mxu0 0.0
  %232 = vmatprep.subr.mxu0 0.0
  %233 = vmatpush1.msra.mxu0 0.0
  %234 = vmatprep.subr.mxu0 0.0
  %235 = vmatpush1.msra.mxu0 0.0
  %236 = vmatprep.subr.mxu0 0.0
  %237 = vmatpush1.msra.mxu0 0.0
  %238 = vmatprep.subr.mxu0 0.0
  %239 = vmatpush1.msra.mxu0 0.0
  %240 = vmatprep.subr.mxu0 0.0
  %241 = vmatpush1.msra.mxu0 0.0
  %242 = vmatprep.subr.mxu0 0.0
  %243 = vmatpush1.msra.mxu0 0.0
  %244 = vmatprep.subr.mxu0 0.0
  %245 = vmatpush1.msra.mxu0 0.0
  %246 = vmatprep.subr.mxu0 0.0
  %247 = vmatpush1.msra.mxu0 0.0
  %248 = vmatprep.subr.mxu0 0.0
  %249 = vmatpush1.msra.mxu0 0.0
  %250 = vmatprep.subr.mxu0 0.0
  %251 = vmatpush1.msra.mxu0 0.0
  %252 = vmatprep.subr.mxu0 0.0
  %253 = vmatpush1.msra.mxu0 0.0
  %254 = vmatprep.subr.mxu0 0.0
  %255 = vmatpush1.msra.mxu0 0.0
  %256 = vmatprep.subr.mxu0 0.0
  %257 = vmatpush1.msra.mxu0 0.0
  %258 = vmatprep.subr.mxu0 0.0
  %259 = vmatpush1.msra.mxu0 0.0
  %260 = vmatprep.subr.mxu0 0.0
  %261 = vmatpush1.msra.mxu0 0.0
  %262 = vmatprep.subr.mxu0 0.0
  %263 = vmatpush1.msra.mxu0 0.0
  %264 = vmatprep.subr.mxu0 0.0
  %265 = vmatpush1.msra.mxu0 0.0
  %266 = vmatprep.subr.mxu0 0.0
  %267 = vmatpush1.msra.mxu0 0.0
  %268 = vmatprep.subr.mxu0 0.0
  %269 = vmatpush1.msra.mxu0 0.0
  %270 = vmatprep.subr.mxu0 0.0
  %271 = vmatpush1.msra.mxu0 0.0
  %272 = vmatprep.subr.mxu0 0.0
  %273 = vmatpush1.msra.mxu0 0.0
  %274 = vmatprep.subr.mxu0 0.0
  %275 = vmatpush1.msra.mxu0 0.0
  %276 = vmatprep.subr.mxu0 0.0
  %277 = vmatpush1.msra.mxu0 0.0
  %278 = vmatprep.subr.mxu0 0.0
  %279 = vmatpush1.msra.mxu0 0.0
  %280 = vmatprep.subr.mxu0 0.0
  %281 = vmatpush1.msra.mxu0 0.0
  %282 = vmatprep.subr.mxu0 0.0
  %283 = vmatpush1.msra.mxu0 0.0
  %284 = vmatprep.subr.mxu0 0.0
  %285 = vmatpush1.msra.mxu0 0.0
  %286 = vmatprep.subr.mxu0 0.0
  %287 = vmatpush1.msra.mxu0 0.0
  %288 = vmatprep.subr.mxu0 0.0
  %289 = vmatpush1.msra.mxu0 0.0
  %290 = vmatprep.mubr.f32.mxu0 0.0
  %291 = vmatmul.mubr.f32.gmra.mrb[0].mxu0 %v220
  %v292 = vpop.f32.mrb[0].mxu0
  %v293 = vadd.f32 0.0, %v292
  %v294 = vpop.f32.mrb[0].mxu0
  %295 = vdwg.mxu0
  %v296 = vadd.f32 %v211, %v293
  %v297 = vmax.f32 %v296, 0.0
  %v298 = vld [vmem:[%s6] sm:$0xff]
  %v299 = vld [vmem:[%s6 + $0x8] sm:$0xff]
  %v300 = vld [vmem:[%s6 + $0x10] sm:$0xff]
  %v301 = vld [vmem:[%s6 + $0x18] sm:$0xff]
  %v302 = vld [vmem:[%s7] sm:$0x1]
  %v304 = vlaneseq
  %v305 = vshrl.u32 %v304, 7
  %v306 = vsub.s32 0, %v305
  %v307 = vrot.slane %v302, %v306
  %vm309 = vcmask 261120
  %v311 = vsel %vm309, %v297, 0
  %313 = vmatprep.subr.mxu0 0.0
  %314 = vmatpush1.msra.mxu0 %v298
  %315 = vmatprep.subr.mxu0 0.0
  %316 = vmatpush1.msra.mxu0 %v299
  %317 = vmatprep.subr.mxu0 0.0
  %318 = vmatpush1.msra.mxu0 %v300
  %319 = vmatprep.subr.mxu0 0.0
  %320 = vmatpush1.msra.mxu0 %v301
  %321 = vmatprep.subr.mxu0 0.0
  %322 = vmatpush1.msra.mxu0 0.0
  %323 = vmatprep.subr.mxu0 0.0
  %324 = vmatpush1.msra.mxu0 0.0
  %325 = vmatprep.subr.mxu0 0.0
  %326 = vmatpush1.msra.mxu0 0.0
  %327 = vmatprep.subr.mxu0 0.0
  %328 = vmatpush1.msra.mxu0 0.0
  %329 = vmatprep.subr.mxu0 0.0
  %330 = vmatpush1.msra.mxu0 0.0
  %331 = vmatprep.subr.mxu0 0.0
  %332 = vmatpush1.msra.mxu0 0.0
  %333 = vmatprep.subr.mxu0 0.0
  %334 = vmatpush1.msra.mxu0 0.0
  %335 = vmatprep.subr.mxu0 0.0
  %336 = vmatpush1.msra.mxu0 0.0
  %337 = vmatprep.subr.mxu0 0.0
  %338 = vmatpush1.msra.mxu0 0.0
  %339 = vmatprep.subr.mxu0 0.0
  %340 = vmatpush1.msra.mxu0 0.0
  %341 = vmatprep.subr.mxu0 0.0
  %342 = vmatpush1.msra.mxu0 0.0
  %343 = vmatprep.subr.mxu0 0.0
  %344 = vmatpush1.msra.mxu0 0.0
  %345 = vmatprep.subr.mxu0 0.0
  %346 = vmatpush1.msra.mxu0 0.0
  %347 = vmatprep.subr.mxu0 0.0
  %348 = vmatpush1.msra.mxu0 0.0
  %349 = vmatprep.subr.mxu0 0.0
  %350 = vmatpush1.msra.mxu0 0.0
  %351 = vmatprep.subr.mxu0 0.0
  %352 = vmatpush1.msra.mxu0 0.0
  %353 = vmatprep.subr.mxu0 0.0
  %354 = vmatpush1.msra.mxu0 0.0
  %355 = vmatprep.subr.mxu0 0.0
  %356 = vmatpush1.msra.mxu0 0.0
  %357 = vmatprep.subr.mxu0 0.0
  %358 = vmatpush1.msra.mxu0 0.0
  %359 = vmatprep.subr.mxu0 0.0
  %360 = vmatpush1.msra.mxu0 0.0
  %361 = vmatprep.subr.mxu0 0.0
  %362 = vmatpush1.msra.mxu0 0.0
  %363 = vmatprep.subr.mxu0 0.0
  %364 = vmatpush1.msra.mxu0 0.0
  %365 = vmatprep.subr.mxu0 0.0
  %366 = vmatpush1.msra.mxu0 0.0
  %367 = vmatprep.subr.mxu0 0.0
  %368 = vmatpush1.msra.mxu0 0.0
  %369 = vmatprep.subr.mxu0 0.0
  %370 = vmatpush1.msra.mxu0 0.0
  %371 = vmatprep.subr.mxu0 0.0
  %372 = vmatpush1.msra.mxu0 0.0
  %373 = vmatprep.subr.mxu0 0.0
  %374 = vmatpush1.msra.mxu0 0.0
  %375 = vmatprep.subr.mxu0 0.0
  %376 = vmatpush1.msra.mxu0 0.0
  %377 = vmatprep.mubr.f32.mxu0 0.0
  %378 = vmatmul.mubr.f32.gmra.mrb[0].mxu0 %v311
  %v379 = vpop.f32.mrb[0].mxu0
  %v380 = vadd.f32 %v307, %v379
  %v381 = vpop.f32.mrb[0].mxu0
  %382 = vdwg.mxu0
  %v383 = vmax.f32 %v380, 0.0
  %v384 = vld [vmem:[%s8] sm:$0x1]
  %v386 = vlaneseq
  %v387 = vshrl.u32 %v386, 7
  %v388 = vsub.s32 0, %v387
  %v389 = vrot.slane %v384, %v388
  %v391 = vmul.f32 %v383, %v389
  %vm392 = vcmask 130048
  %v393 = vsel %vm392, %v391, 0.0
  %394 = vadd.xlane.f32.xlu0 %v393
  %v395 = vpop.xlane.xlu0 %394
  %s396 = sld [smem:[#allocation2]]
  %v397 = vstv %s396
  %v398 = vadd.f32 %v395, %v397
  %vm399 = vcmask 7168
  %400 = vst.msk [vmem:[%s10] sm:$0xff] %vm399, %v398
  // Predicated region
  $region42: #{tpu_custom_call.1} parent=0 // pred_check
    _
  $region43: #{tpu_custom_call.1} parent=0 // pred_check_branch
    %402 = sbr.rel (0) target = $region45
  $region44: #{tpu_custom_call.1} parent=0 // pred_region
    _
  $region45: #{tpu_custom_call.1} parent=0 // pred_fallthru
    _
  // Predicated region
  $region46: #{tpu_custom_call.1} parent=0 // pred_check
    _
  $region47: #{tpu_custom_call.1} parent=0 // pred_check_branch
    %404 = sbr.rel (0) target = $region49
  $region48: #{tpu_custom_call.1} parent=0 // pred_region
    _
  $region49: #{tpu_custom_call.1} parent=0 // pred_fallthru
    _

</llo_original>
